<compile_context>
chip_gen: v7x
topology: tpu7x:2x2x1
jax: 0.10.0
libtpu: 0.0.40
codegen_flags: <defaults>
</compile_context>

<pallas_src>
import functools

import jax
import jax.numpy as jnp
from jax.experimental import pallas as pl
from jax.experimental.pallas import tpu as pltpu

DICE_SMOOTH = 1.0
FOCAL_ALPHA = 0.25
FOCAL_GAMMA = 2.0  # static; implemented below as an explicit square
EPS = 1e-8


def _combo_loss_kernel(inv_pixels, logits_ref, target_ref, out_ref,
                       inter_acc, psum_acc, cnt_acc, focal_acc):
    """Per-tile body.

    logits_ref : (C, TILE_H, W) f32   one image's channel slab for a row tile
    target_ref : (TILE_H, W)    i32   class ids for the same pixels
    out_ref    : (1, 1)         f32   combined loss (written once at last step)
    *_acc      : VMEM scratch accumulators, persistent across the grid
    """
    n = pl.program_id(0)
    h = pl.program_id(1)
    is_first = jnp.logical_and(n == 0, h == 0)
    is_last = jnp.logical_and(n == pl.num_programs(0) - 1,
                              h == pl.num_programs(1) - 1)

    @pl.when(is_first)
    def _():
        inter_acc[...] = jnp.zeros_like(inter_acc)
        psum_acc[...] = jnp.zeros_like(psum_acc)
        cnt_acc[...] = jnp.zeros_like(cnt_acc)
        focal_acc[...] = jnp.zeros_like(focal_acc)

    logits = logits_ref[...]                        # (C, TH, W) f32
    tgt = target_ref[...]                           # (TH, W)    i32
    C = logits.shape[0]

    # ---- softmax over the channel (leading) axis: pure VPU, no XLU ----
    m = jnp.max(logits, axis=0)                     # (TH, W)
    e = jnp.exp(logits - m[None, :, :])             # (C, TH, W)
    denom = jnp.sum(e, axis=0)                      # (TH, W)
    inv_denom = pl.reciprocal(denom, approx=True)   # EUP vrcp
    probs = e * inv_denom[None, :, :]               # (C, TH, W)

    # ---- one-hot mask; probs*one_hot computed ONCE, reused for dice & focal ----
    cls = jax.lax.broadcasted_iota(jnp.int32, logits.shape, 0)
    oh = (cls == tgt[None, :, :]).astype(jnp.float32)   # (C, TH, W)
    po = probs * oh                                      # (C, TH, W)

    def _per_class_sum(x):                          # (C, TH, W) -> (1, C)
        return jnp.sum(jnp.sum(x, axis=2), axis=1)[None, :]

    inter_acc[...] += _per_class_sum(po)            # intersection
    psum_acc[...] += _per_class_sum(probs)          # sum of probs per class
    cnt_acc[...] += _per_class_sum(oh)              # one-hot pixel count per class

    # ---- focal partial sum (gamma == 2 -> explicit square, no pow) ----
    pt = jnp.sum(po, axis=0)                        # (TH, W)
    one_minus = 1.0 - pt
    focal = (-FOCAL_ALPHA) * one_minus * one_minus * jnp.log(pt + EPS)
    focal_acc[...] += jnp.sum(focal)

    @pl.when(is_last)
    def _():
        inter = inter_acc[...]                      # (1, C)
        card = psum_acc[...] + cnt_acc[...]         # (1, C)
        dice_pc = (2.0 * inter + DICE_SMOOTH) / (card + DICE_SMOOTH)
        dice_loss = 1.0 - jnp.sum(dice_pc) * (1.0 / C)
        out_ref[...] = dice_loss + focal_acc[...] * inv_pixels


def _pick_tile_h(H, C, W, budget_bytes=4 * 1024 * 1024):
    """Largest row-tile (multiple of 8, divisor of H, or H itself) whose
    double-buffered logits+target blocks stay under `budget_bytes` -- sized so
    it fits comfortably inside v7x's 32 MiB scoped VMEM as well."""
    def tile_bytes(th):
        return 2 * (C * th * W * 4 + th * W * 4)   # 2x for double buffering

    if tile_bytes(H) <= budget_bytes:
        return H
    best = None
    th = 8
    while th < H:
        if H % th == 0 and tile_bytes(th) <= budget_bytes:
            best = th
        th += 8
    return best if best is not None else H


def focal_dice_combo_loss(x, target, *, tile_h=None):
    """x: (N, C, H, W) float logits; target: (N, 1, H, W) integer class ids."""
    N, C, H, W = x.shape
    assert target.shape == (N, 1, H, W)
    x = x.astype(jnp.float32)           # no transpose/reshape: NCHW goes straight in
    tgt = target.astype(jnp.int32)

    if tile_h is None:
        tile_h = _pick_tile_h(H, C, W)
    assert H % tile_h == 0, "tile_h must evenly divide H"
    nh = H // tile_h
    inv_pixels = 1.0 / float(N * H * W)

    kernel = functools.partial(_combo_loss_kernel, inv_pixels)

    # TODO(synk): on v7x a leading 'parallel' axis of size 2 with per-core
    # partial sums combined in the wrapper would engage both TensorCores.
    out = pl.pallas_call(
        kernel,
        out_shape=jax.ShapeDtypeStruct((1, 1), jnp.float32),
        grid_spec=pltpu.PrefetchScalarGridSpec(
            num_scalar_prefetch=0,
            grid=(N, nh),
            in_specs=[
                # logits: one image, all channels, a row-tile of H, full W
                pl.BlockSpec((None, C, tile_h, W), lambda n, h: (n, 0, h, 0)),
                # target: matching (tile_h, W) slab
                pl.BlockSpec((None, None, tile_h, W), lambda n, h: (n, 0, h, 0)),
            ],
            out_specs=pl.BlockSpec((1, 1), lambda n, h: (0, 0)),
            scratch_shapes=[
                pltpu.VMEM((1, C), jnp.float32),   # intersection per class
                pltpu.VMEM((1, C), jnp.float32),   # sum(probs) per class
                pltpu.VMEM((1, C), jnp.float32),   # one-hot count per class
                pltpu.VMEM((1, 1), jnp.float32),   # focal sum
            ],
        ),
        compiler_params=pltpu.CompilerParams(
            dimension_semantics=("arbitrary", "arbitrary"),
            vmem_limit_bytes=32 * 1024 * 1024,
        ),
    )(x, tgt)
    return out[0, 0]


def _reference(x, target):
    # pure-JAX reference for sanity checking
    N, C, H, W = x.shape
    probs = jax.nn.softmax(x.astype(jnp.float32), axis=1)          # (N,C,H,W)
    t = target.squeeze(1)                                          # (N,H,W)
    oh = jax.nn.one_hot(t, C, dtype=jnp.float32)                   # (N,H,W,C)
    oh = jnp.transpose(oh, (0, 3, 1, 2))                           # (N,C,H,W)
    inter = jnp.sum(probs * oh, axis=(0, 2, 3))
    card = jnp.sum(probs + oh, axis=(0, 2, 3))
    dice = 1.0 - jnp.mean((2 * inter + DICE_SMOOTH) / (card + DICE_SMOOTH))
    pt = jnp.sum(probs * oh, axis=1)
    focal = jnp.mean(-FOCAL_ALPHA * (1.0 - pt) ** FOCAL_GAMMA * jnp.log(pt + EPS))
    return dice + focal


if __name__ == "__main__":
    key = jax.random.PRNGKey(0)
    k1, k2 = jax.random.split(key)
    N, C, H, W = 2, 4, 16, 16
    x = jax.random.normal(k1, (N, C, H, W), dtype=jnp.float32)
    target = jax.random.randint(k2, (N, 1, H, W), 0, C, dtype=jnp.int32)

    # tile_h=8 -> grid (2, 2): exercises zero-init / accumulate / finalize
    # across multiple grid steps on both axes.
    loss = focal_dice_combo_loss(x, target, tile_h=8)
    jax.block_until_ready(loss)

    ref = _reference(x, target)
    # tolerance accounts for the EUP approximate-reciprocal softmax denominator
    assert jnp.allclose(loss, ref, rtol=2e-3, atol=2e-3), (loss, ref)
    print("KERNEL_OK")
</pallas_src>

<mosaic_0001>
module attributes {stable_mosaic.version = 11 : i64} {
  func.func @_combo_loss_kernel(%arg0: i32, %arg1: i32, %arg2: memref<1x4x8x16xf32, #tpu.memory_space<vmem>>, %arg3: memref<1x1x8x16xi32, #tpu.memory_space<vmem>>, %arg4: memref<1x1xf32, #tpu.memory_space<vmem>>, %arg5: memref<1x4xf32, #tpu.memory_space<vmem>>, %arg6: memref<1x4xf32, #tpu.memory_space<vmem>>, %arg7: memref<1x4xf32, #tpu.memory_space<vmem>>, %arg8: memref<1x1xf32, #tpu.memory_space<vmem>>) attributes {dimension_semantics = [#tpu.dimension_semantics<arbitrary>, #tpu.dimension_semantics<arbitrary>], iteration_bounds = array<i64: 2, 2>, scalar_prefetch = 0 : i64, scratch_operands = 4 : i64, tpu.core_type = #tpu.core_type<tc>, window_params = [{transform_indices = @transform_0, window_bounds = array<i64: 1, 4, 8, 16>}, {transform_indices = @transform_1, window_bounds = array<i64: 1, 1, 8, 16>}, {pipeline_mode = #tpu.pipeline_mode<synchronous>, transform_indices = @transform_2, window_bounds = array<i64: 1, 1>}]} {
    %c0_i32 = arith.constant 0 : i32
    %0 = arith.cmpi eq, %arg0, %c0_i32 : i32
    %c0_i32_0 = arith.constant 0 : i32
    %1 = arith.cmpi eq, %arg1, %c0_i32_0 : i32
    %2 = arith.andi %0, %1 : i1
    %c1_i32 = arith.constant 1 : i32
    %3 = arith.cmpi eq, %arg0, %c1_i32 : i32
    %c1_i32_1 = arith.constant 1 : i32
    %4 = arith.cmpi eq, %arg1, %c1_i32_1 : i32
    %5 = arith.andi %3, %4 : i1
    %6 = arith.extui %2 : i1 to i32
    %c0_i32_2 = arith.constant 0 : i32
    %7 = arith.cmpi ne, %6, %c0_i32_2 : i32
    scf.if %7 {
      %cst_39 = arith.constant 0.000000e+00 : f32
      %67 = vector.broadcast %cst_39 : f32 to vector<1x4xf32>
      %c0_40 = arith.constant 0 : index
      %c0_41 = arith.constant 0 : index
      %68 = vector.load %arg5[%c0_40, %c0_41] : memref<1x4xf32, #tpu.memory_space<vmem>>, vector<1x4xf32>
      tpu.vector_store %arg5[%c0_40, %c0_41], %67 {strides = array<i32>} : memref<1x4xf32, #tpu.memory_space<vmem>>, vector<1x4xf32>,
      %cst_42 = arith.constant 0.000000e+00 : f32
      %69 = vector.broadcast %cst_42 : f32 to vector<1x4xf32>
      %c0_43 = arith.constant 0 : index
      %c0_44 = arith.constant 0 : index
      %70 = vector.load %arg6[%c0_43, %c0_44] : memref<1x4xf32, #tpu.memory_space<vmem>>, vector<1x4xf32>
      tpu.vector_store %arg6[%c0_43, %c0_44], %69 {strides = array<i32>} : memref<1x4xf32, #tpu.memory_space<vmem>>, vector<1x4xf32>,
      %cst_45 = arith.constant 0.000000e+00 : f32
      %71 = vector.broadcast %cst_45 : f32 to vector<1x4xf32>
      %c0_46 = arith.constant 0 : index
      %c0_47 = arith.constant 0 : index
      %72 = vector.load %arg7[%c0_46, %c0_47] : memref<1x4xf32, #tpu.memory_space<vmem>>, vector<1x4xf32>
      tpu.vector_store %arg7[%c0_46, %c0_47], %71 {strides = array<i32>} : memref<1x4xf32, #tpu.memory_space<vmem>>, vector<1x4xf32>,
      %cst_48 = arith.constant 0.000000e+00 : f32
      %73 = vector.broadcast %cst_48 : f32 to vector<1x1xf32>
      %c0_49 = arith.constant 0 : index
      %c0_50 = arith.constant 0 : index
      %74 = vector.load %arg8[%c0_49, %c0_50] : memref<1x1xf32, #tpu.memory_space<vmem>>, vector<1x1xf32>
      tpu.vector_store %arg8[%c0_49, %c0_50], %73 {strides = array<i32>} : memref<1x1xf32, #tpu.memory_space<vmem>>, vector<1x1xf32>,
    } else {
    }
    %c0 = arith.constant 0 : index
    %c0_3 = arith.constant 0 : index
    %c0_4 = arith.constant 0 : index
    %c0_5 = arith.constant 0 : index
    %8 = vector.load %arg2[%c0, %c0_3, %c0_4, %c0_5] : memref<1x4x8x16xf32, #tpu.memory_space<vmem>>, vector<1x4x8x16xf32>
    %9 = vector.shape_cast %8 : vector<1x4x8x16xf32> to vector<4x8x16xf32>
    %c0_6 = arith.constant 0 : index
    %c0_7 = arith.constant 0 : index
    %c0_8 = arith.constant 0 : index
    %c0_9 = arith.constant 0 : index
    %10 = vector.load %arg3[%c0_6, %c0_7, %c0_8, %c0_9] : memref<1x1x8x16xi32, #tpu.memory_space<vmem>>, vector<1x1x8x16xi32>
    %11 = vector.shape_cast %10 : vector<1x1x8x16xi32> to vector<8x16xi32>
    %cst = arith.constant dense<0xFF800000> : vector<8x16xf32>
    %12 = vector.multi_reduction <maximumf>, %9, %cst [0] : vector<4x8x16xf32> to vector<8x16xf32>
    %13 = vector.shape_cast %12 : vector<8x16xf32> to vector<1x8x16xf32>
    %14 = vector.broadcast %13 : vector<1x8x16xf32> to vector<4x8x16xf32>
    %15 = arith.subf %9, %14 : vector<4x8x16xf32>
    %16 = math.exp %15 : vector<4x8x16xf32>
    %cst_10 = arith.constant dense<0.000000e+00> : vector<8x16xf32>
    %17 = vector.multi_reduction <add>, %16, %cst_10 [0] : vector<4x8x16xf32> to vector<8x16xf32>
    %18 = tpu.reciprocal %17 {approx = true} : vector<8x16xf32> -> vector<8x16xf32>
    %19 = vector.shape_cast %18 : vector<8x16xf32> to vector<1x8x16xf32>
    %20 = vector.broadcast %19 : vector<1x8x16xf32> to vector<4x8x16xf32>
    %21 = arith.mulf %16, %20 : vector<4x8x16xf32>
    %22 = tpu.iota {dimensions = array<i32: 0>} : vector<4x8x16xi32>
    %23 = vector.shape_cast %11 : vector<8x16xi32> to vector<1x8x16xi32>
    %24 = vector.broadcast %23 : vector<1x8x16xi32> to vector<4x8x16xi32>
    %25 = arith.cmpi eq, %22, %24 : vector<4x8x16xi32>
    %26 = arith.extui %25 : vector<4x8x16xi1> to vector<4x8x16xi32>
    %27 = arith.sitofp %26 : vector<4x8x16xi32> to vector<4x8x16xf32>
    %28 = arith.mulf %21, %27 : vector<4x8x16xf32>
    %c0_11 = arith.constant 0 : index
    %c0_12 = arith.constant 0 : index
    %29 = vector.load %arg5[%c0_11, %c0_12] : memref<1x4xf32, #tpu.memory_space<vmem>>, vector<1x4xf32>
    %cst_13 = arith.constant dense<0.000000e+00> : vector<4x8xf32>
    %30 = vector.multi_reduction <add>, %28, %cst_13 [2] : vector<4x8x16xf32> to vector<4x8xf32>
    %cst_14 = arith.constant dense<0.000000e+00> : vector<4xf32>
    %31 = vector.multi_reduction <add>, %30, %cst_14 [1] : vector<4x8xf32> to vector<4xf32>
    %32 = vector.shape_cast %31 : vector<4xf32> to vector<1x4xf32>
    %33 = arith.addf %29, %32 : vector<1x4xf32>
    %c0_15 = arith.constant 0 : index
    %c0_16 = arith.constant 0 : index
    %34 = vector.load %arg5[%c0_15, %c0_16] : memref<1x4xf32, #tpu.memory_space<vmem>>, vector<1x4xf32>
    tpu.vector_store %arg5[%c0_15, %c0_16], %33 {strides = array<i32>} : memref<1x4xf32, #tpu.memory_space<vmem>>, vector<1x4xf32>,
    %c0_17 = arith.constant 0 : index
    %c0_18 = arith.constant 0 : index
    %35 = vector.load %arg6[%c0_17, %c0_18] : memref<1x4xf32, #tpu.memory_space<vmem>>, vector<1x4xf32>
    %cst_19 = arith.constant dense<0.000000e+00> : vector<4x8xf32>
    %36 = vector.multi_reduction <add>, %21, %cst_19 [2] : vector<4x8x16xf32> to vector<4x8xf32>
    %cst_20 = arith.constant dense<0.000000e+00> : vector<4xf32>
    %37 = vector.multi_reduction <add>, %36, %cst_20 [1] : vector<4x8xf32> to vector<4xf32>
    %38 = vector.shape_cast %37 : vector<4xf32> to vector<1x4xf32>
    %39 = arith.addf %35, %38 : vector<1x4xf32>
    %c0_21 = arith.constant 0 : index
    %c0_22 = arith.constant 0 : index
    %40 = vector.load %arg6[%c0_21, %c0_22] : memref<1x4xf32, #tpu.memory_space<vmem>>, vector<1x4xf32>
    tpu.vector_store %arg6[%c0_21, %c0_22], %39 {strides = array<i32>} : memref<1x4xf32, #tpu.memory_space<vmem>>, vector<1x4xf32>,
    %c0_23 = arith.constant 0 : index
    %c0_24 = arith.constant 0 : index
    %41 = vector.load %arg7[%c0_23, %c0_24] : memref<1x4xf32, #tpu.memory_space<vmem>>, vector<1x4xf32>
    %cst_25 = arith.constant dense<0.000000e+00> : vector<4x8xf32>
    %42 = vector.multi_reduction <add>, %27, %cst_25 [2] : vector<4x8x16xf32> to vector<4x8xf32>
    %cst_26 = arith.constant dense<0.000000e+00> : vector<4xf32>
    %43 = vector.multi_reduction <add>, %42, %cst_26 [1] : vector<4x8xf32> to vector<4xf32>
    %44 = vector.shape_cast %43 : vector<4xf32> to vector<1x4xf32>
    %45 = arith.addf %41, %44 : vector<1x4xf32>
    %c0_27 = arith.constant 0 : index
    %c0_28 = arith.constant 0 : index
    %46 = vector.load %arg7[%c0_27, %c0_28] : memref<1x4xf32, #tpu.memory_space<vmem>>, vector<1x4xf32>
    tpu.vector_store %arg7[%c0_27, %c0_28], %45 {strides = array<i32>} : memref<1x4xf32, #tpu.memory_space<vmem>>, vector<1x4xf32>,
    %cst_29 = arith.constant dense<0.000000e+00> : vector<8x16xf32>
    %47 = vector.multi_reduction <add>, %28, %cst_29 [0] : vector<4x8x16xf32> to vector<8x16xf32>
    %cst_30 = arith.constant 1.000000e+00 : f32
    %48 = vector.broadcast %cst_30 : f32 to vector<8x16xf32>
    %49 = arith.subf %48, %47 : vector<8x16xf32>
    %cst_31 = arith.constant -2.500000e-01 : f32
    %50 = vector.broadcast %cst_31 : f32 to vector<8x16xf32>
    %51 = arith.mulf %50, %49 : vector<8x16xf32>
    %52 = arith.mulf %51, %49 : vector<8x16xf32>
    %cst_32 = arith.constant 9.99999993E-9 : f32
    %53 = vector.broadcast %cst_32 : f32 to vector<8x16xf32>
    %54 = arith.addf %47, %53 : vector<8x16xf32>
    %55 = math.log %54 : vector<8x16xf32>
    %56 = arith.mulf %52, %55 : vector<8x16xf32>
    %c0_33 = arith.constant 0 : index
    %c0_34 = arith.constant 0 : index
    %57 = vector.load %arg8[%c0_33, %c0_34] : memref<1x1xf32, #tpu.memory_space<vmem>>, vector<1x1xf32>
    %58 = vector.shape_cast %56 : vector<8x16xf32> to vector<1x8x16xf32>
    %cst_35 = arith.constant dense<0.000000e+00> : vector<1xf32>
    %59 = vector.multi_reduction <add>, %58, %cst_35 [1, 2] : vector<1x8x16xf32> to vector<1xf32>
    %60 = vector.shape_cast %59 : vector<1xf32> to vector<1x1x1xf32>
    %61 = vector.extract %60[0, 0, 0] : f32 from vector<1x1x1xf32>
    %62 = vector.broadcast %61 : f32 to vector<1x1xf32>
    %63 = arith.addf %57, %62 : vector<1x1xf32>
    %c0_36 = arith.constant 0 : index
    %c0_37 = arith.constant 0 : index
    %64 = vector.load %arg8[%c0_36, %c0_37] : memref<1x1xf32, #tpu.memory_space<vmem>>, vector<1x1xf32>
    tpu.vector_store %arg8[%c0_36, %c0_37], %63 {strides = array<i32>} : memref<1x1xf32, #tpu.memory_space<vmem>>, vector<1x1xf32>,
    %65 = arith.extui %5 : i1 to i32
    %c0_i32_38 = arith.constant 0 : i32
    %66 = arith.cmpi ne, %65, %c0_i32_38 : i32
    scf.if %66 {
      %c0_39 = arith.constant 0 : index
      %c0_40 = arith.constant 0 : index
      %67 = vector.load %arg5[%c0_39, %c0_40] : memref<1x4xf32, #tpu.memory_space<vmem>>, vector<1x4xf32>
      %c0_41 = arith.constant 0 : index
      %c0_42 = arith.constant 0 : index
      %68 = vector.load %arg6[%c0_41, %c0_42] : memref<1x4xf32, #tpu.memory_space<vmem>>, vector<1x4xf32>
      %c0_43 = arith.constant 0 : index
      %c0_44 = arith.constant 0 : index
      %69 = vector.load %arg7[%c0_43, %c0_44] : memref<1x4xf32, #tpu.memory_space<vmem>>, vector<1x4xf32>
      %70 = arith.addf %68, %69 : vector<1x4xf32>
      %cst_45 = arith.constant 2.000000e+00 : f32
      %71 = vector.broadcast %cst_45 : f32 to vector<1x4xf32>
      %72 = arith.mulf %71, %67 : vector<1x4xf32>
      %cst_46 = arith.constant 1.000000e+00 : f32
      %73 = vector.broadcast %cst_46 : f32 to vector<1x4xf32>
      %74 = arith.addf %72, %73 : vector<1x4xf32>
      %cst_47 = arith.constant 1.000000e+00 : f32
      %75 = vector.broadcast %cst_47 : f32 to vector<1x4xf32>
      %76 = arith.addf %70, %75 : vector<1x4xf32>
      %77 = arith.divf %74, %76 : vector<1x4xf32>
      %78 = vector.shape_cast %77 : vector<1x4xf32> to vector<1x1x4xf32>
      %cst_48 = arith.constant dense<0.000000e+00> : vector<1xf32>
      %79 = vector.multi_reduction <add>, %78, %cst_48 [1, 2] : vector<1x1x4xf32> to vector<1xf32>
      %80 = vector.shape_cast %79 : vector<1xf32> to vector<1x1x1xf32>
      %81 = vector.extract %80[0, 0, 0] : f32 from vector<1x1x1xf32>
      %cst_49 = arith.constant 2.500000e-01 : f32
      %82 = arith.mulf %81, %cst_49 : f32
      %cst_50 = arith.constant 1.000000e+00 : f32
      %83 = arith.subf %cst_50, %82 : f32
      %c0_51 = arith.constant 0 : index
      %c0_52 = arith.constant 0 : index
      %84 = vector.load %arg8[%c0_51, %c0_52] : memref<1x1xf32, #tpu.memory_space<vmem>>, vector<1x1xf32>
      %cst_53 = arith.constant 0.001953125 : f32
      %85 = vector.broadcast %cst_53 : f32 to vector<1x1xf32>
      %86 = arith.mulf %84, %85 : vector<1x1xf32>
      %87 = vector.broadcast %83 : f32 to vector<1x1xf32>
      %88 = arith.addf %87, %86 : vector<1x1xf32>
      %c0_54 = arith.constant 0 : index
      %c0_55 = arith.constant 0 : index
      %89 = vector.load %arg4[%c0_54, %c0_55] : memref<1x1xf32, #tpu.memory_space<vmem>>, vector<1x1xf32>
      tpu.vector_store %arg4[%c0_54, %c0_55], %88 {strides = array<i32>} : memref<1x1xf32, #tpu.memory_space<vmem>>, vector<1x1xf32>,
    } else {
    }
    return
  }
  func.func @transform_0(%arg0: i32, %arg1: i32) -> (i32, i32, i32, i32) {
    %c0_i32 = arith.constant 0 : i32
    %c0_i32_0 = arith.constant 0 : i32
    %c0_i32_1 = arith.constant 0 : i32
    return %arg0, %c0_i32, %arg1, %c0_i32_0 : i32, i32, i32, i32
  }
  func.func @transform_1(%arg0: i32, %arg1: i32) -> (i32, i32, i32, i32) {
    %c0_i32 = arith.constant 0 : i32
    %c0_i32_0 = arith.constant 0 : i32
    %c0_i32_1 = arith.constant 0 : i32
    return %arg0, %c0_i32, %arg1, %c0_i32_0 : i32, i32, i32, i32
  }
  func.func @transform_2(%arg0: i32, %arg1: i32) -> (i32, i32) {
    %c0_i32 = arith.constant 0 : i32
    %c0_i32_0 = arith.constant 0 : i32
    %c0_i32_1 = arith.constant 0 : i32
    return %c0_i32, %c0_i32_0 : i32, i32
  }
}

</mosaic_0001>

<llo_original>
// kernel: tpu_custom_call.1
$region0: #{tpu_custom_call.1}
  #allocation0 [shape = 'u32[]', space=smem, size = 0x4, offset = 0x4, fixed_abs, tag = 'smem constant byte address 0x4 - core index']
  #allocation1 [shape = 'u32[144,128]{1,0:T(1,128)}', space=vmem, size = 0x12000, scoped, tag = 'internal scratch']
  #allocation2 [shape = 'f32[1,4]{1,0:T(1,128)}', space=vmem, size = 0x200, scoped, tag = 'scratch operand']
  #allocation3 [shape = 'f32[1,4]{1,0:T(1,128)}', space=vmem, size = 0x200, scoped, tag = 'scratch operand']
  #allocation4 [shape = 'f32[1,4]{1,0:T(1,128)}', space=vmem, size = 0x200, scoped, tag = 'scratch operand']
  #allocation5 [shape = 'f32[1,1]{1,0:T(1,128)}', space=vmem, size = 0x200, scoped, tag = 'scratch operand']
  %s0 = inlined_call_operand.hbm [shape: f32[2,4,16,16], index: 0, kind: input, shape index: {}]
  %s1 = inlined_call_operand.hbm [shape: s32[2,1,16,16], index: 1, kind: input, shape index: {}]
  %s2 = inlined_call_operand.hbm [shape: f32[1,1], index: 2, kind: output, shape index: {}]
  %s3 = sld [smem:[#allocation0]]
  $region57: #{tpu_custom_call.1} parent=0
    _
  %s5 = ssub.s32 1, %s3
  %s6 = scalar_select 0, %s5, %s3
  $region1: #{tpu_custom_call.1} parent=0
    #allocation6 [shape = 'u8[32768]{0}', space=vmem, size = 0x8000, scoped, tag = 'input window, operand 0']
    #allocation7 [shape = 's32[2]{0}', space=sflag, size = 0x8, scoped, tag = 'scoped memory for tpu_custom_call.1']
    #allocation8 [shape = 's32[2]{0}', space=sflag, size = 0x8, scoped, tag = 'scoped memory for tpu_custom_call.1']
    #allocation9 [shape = 'u8[8192]{0}', space=vmem, size = 0x2000, scoped, tag = 'input window, operand 1']
    #allocation10 [shape = 's32[2]{0}', space=sflag, size = 0x8, scoped, tag = 'scoped memory for tpu_custom_call.1']
    #allocation11 [shape = 'u8[512]{0}', space=vmem, size = 0x400, scoped, tag = 'output window, operand 0, single buffered']
    %7 = vsyncpa [#allocation7], 0
    %s8 = scalar_lea.sflag [#allocation7], 1
    %9 = vsyncpa %s8, 0
    %10 = vsyncpa [#allocation10], 0
    %s11 = scalar_lea.sflag [#allocation10], 1
    %12 = vsyncpa %s11, 0
    %13 = vsyncpa [#allocation8], 0
    loop: start=0, step=1, limit=6
    $region2: #{tpu_custom_call.1} parent=1 // loop_pre_header
      _
    $region3: #{tpu_custom_call.1} parent=1 // loop_header
      %s15 = sphi 0, %s19
      %p16 = scmp.ge.s32.totalorder %s15, 6
      %s22 = sphi 0, %s34
      %s23 = sphi 0, %s30
      %s24 = sphi 0, %s22
      %s25 = sphi 0, %s23
      %s26 = sphi 0, %s24
      %s27 = sphi 0, %s25
      %s39 = sphi 0, %s41
      %s42 = sphi 0, %s39
      %s43 = sphi 0, %s42
      %s59 = sphi 0, %s43
      %s67 = sphi 0, %s69
      %s70 = sphi 0, %s67
      %s71 = sphi 0, %s70
      %s87 = sphi 0, %s71
      %s91 = sphi 0, %s91
      %s93 = sphi 0, %s91
      %s94 = sphi 0, %s93
      %s108 = sphi 0, %s94
    $region4: #{tpu_custom_call.1} parent=1 // loop_header_branch
      %18 = sbr.rel (%p16) target = $region8
    $region5: #{tpu_custom_call.1} parent=1 // loop_body
      %s20 = ssub.s32 %s15, 1
      %s21 = ssub.s32 %s15, 2
      %s28 = sadd.s32 1, %s23
      %p29 = scmp.ge.s32.totalorder %s28, 2
      %s30 = scalar_select %p29, 0, %s28
      %s31 = sadd.s32 1, %s22
      %s32 = scalar_select %p29, %s31, %s22
      %p33 = scmp.ge.s32.totalorder %s32, 2
      %s34 = scalar_select %p33, 0, %s32
      %s35 = ssub.s32 %s22, %s34
      %s36 = ssub.s32 %s23, %s30
      %s37 = sor.u32 %s35, %s36
      %p38 = scmp.eq.s32.totalorder %s37, 0
      %s40 = sadd.s32 %s39, 1
      %s41 = scalar_select %p38, %s39, %s40
      %p44 = pneg %p38
      %p45 = scmp.eq.s32.totalorder %s15, 3
      %p46 = por %p44, %p45
      %p47 = scmp.ne.s32.totalorder %s39, %s42
      %p48 = scmp.eq.s32.totalorder %s15, 0
      %p49 = por %p47, %p48
      %p50 = scmp.ne.s32.totalorder %s39, %s42
      %p51 = scmp.eq.s32.totalorder %s20, 3
      %p52 = por %p50, %p51
      %p53 = scmp.ne.s32.totalorder %s42, %s43
      %p54 = scmp.eq.s32.totalorder %s20, 0
      %p55 = por %p53, %p54
      %p56 = scmp.ne.s32.totalorder %s42, %s43
      %p57 = scmp.eq.s32.totalorder %s21, 3
      %p58 = por %p56, %p57
      %p60 = scmp.ne.s32.totalorder %s43, %s59
      %p61 = scmp.eq.s32.totalorder %s21, 0
      %p62 = por %p60, %p61
      %s63 = ssub.s32 %s22, %s34
      %s64 = ssub.s32 %s23, %s30
      %s65 = sor.u32 %s63, %s64
      %p66 = scmp.eq.s32.totalorder %s65, 0
      %s68 = sadd.s32 %s67, 1
      %s69 = scalar_select %p66, %s67, %s68
      %p72 = pneg %p66
      %p73 = scmp.eq.s32.totalorder %s15, 3
      %p74 = por %p72, %p73
      %p75 = scmp.ne.s32.totalorder %s67, %s70
      %p76 = scmp.eq.s32.totalorder %s15, 0
      %p77 = por %p75, %p76
      %p78 = scmp.ne.s32.totalorder %s67, %s70
      %p79 = scmp.eq.s32.totalorder %s20, 3
      %p80 = por %p78, %p79
      %p81 = scmp.ne.s32.totalorder %s70, %s71
      %p82 = scmp.eq.s32.totalorder %s20, 0
      %p83 = por %p81, %p82
      %p84 = scmp.ne.s32.totalorder %s70, %s71
      %p85 = scmp.eq.s32.totalorder %s21, 3
      %p86 = por %p84, %p85
      %p88 = scmp.ne.s32.totalorder %s71, %s87
      %p89 = scmp.eq.s32.totalorder %s21, 0
      %p90 = por %p88, %p89
      %s92 = sadd.s32 %s91, 1
      %p95 = scmp.eq.s32.totalorder %s15, 3
      %p96 = scmp.ne.s32.totalorder %s91, %s93
      %p97 = scmp.eq.s32.totalorder %s15, 0
      %p98 = por %p96, %p97
      %p99 = scmp.ne.s32.totalorder %s91, %s93
      %p100 = scmp.eq.s32.totalorder %s20, 3
      %p101 = por %p99, %p100
      %p102 = scmp.ne.s32.totalorder %s93, %s94
      %p103 = scmp.eq.s32.totalorder %s20, 0
      %p104 = por %p102, %p103
      %p105 = scmp.ne.s32.totalorder %s93, %s94
      %p106 = scmp.eq.s32.totalorder %s21, 3
      %p107 = por %p105, %p106
      %p109 = scmp.ne.s32.totalorder %s94, %s108
      %p110 = scmp.eq.s32.totalorder %s21, 0
      %p111 = por %p109, %p110
      %p112 = scmp.le.s32.totalorder 1, %s15
      %p113 = scmp.lt.s32.totalorder %s15, 5
      %p114 = pnand %p112, %p113
      %p115 = pneg %p114
      // Predicated region
      $region9: #{tpu_custom_call.1} parent=5 // pred_check
        _
      $region10: #{tpu_custom_call.1} parent=5 // pred_check_branch
        %117 = sbr.rel (%p114) target = $region12
      $region11: #{tpu_custom_call.1} parent=5 // pred_region
        %s118 = ssub.s32 %s15, 1
      $region12: #{tpu_custom_call.1} parent=5 // pred_fallthru
        _
      %p119 = scmp.lt.s32.totalorder %s15, 4
      // Predicated region
      $region13: #{tpu_custom_call.1} parent=5 // pred_check
        %p120 = pneg %p119
      $region14: #{tpu_custom_call.1} parent=5 // pred_check_branch
        %122 = sbr.rel (%p120) target = $region16
      $region15: #{tpu_custom_call.1} parent=5 // pred_region
        // Predicated region
        $region17: #{tpu_custom_call.1} parent=15 // pred_check
          %p123 = pneg %p49
        $region18: #{tpu_custom_call.1} parent=15 // pred_check_branch
          %125 = sbr.rel (%p123) target = $region20
        $region19: #{tpu_custom_call.1} parent=15 // pred_region
          %s126 = sand.u32 %s39, 1
          %s127 = scalar_lea.sflag [#allocation7], %s126
          %s128 = sand.u32 %s39, 1
          %s129 = smul.addr %s128, 32
          %s130 = scalar_lea.vmem [#allocation6], %s129
          %s132 = ssub.s32 512, 512
          %133 = vsyncadd %s127, %s132
          %s134 = smul.addr %s22, 8
          %s135 = sadd.s32 %s23, %s134
          %s136 = smul.addr %s135, 128
          %s137 = scalar_lea.hbm %s0, %s136
          %s138 = sshll.u32 %s130, 4
          %s139 = int_to_ptr.vmem [resolvable:$true] %s138
          %144 = dma.hbm_to_vmem [thread:$0]  %s137, 512, %s139, %s127, 256, 128, 8
        $region20: #{tpu_custom_call.1} parent=15 // pred_fallthru
          _
        // Predicated region
        $region21: #{tpu_custom_call.1} parent=15 // pred_check
          %p145 = pneg %p77
        $region22: #{tpu_custom_call.1} parent=15 // pred_check_branch
          %147 = sbr.rel (%p145) target = $region24
        $region23: #{tpu_custom_call.1} parent=15 // pred_region
          %s148 = sand.u32 %s67, 1
          %s149 = scalar_lea.sflag [#allocation10], %s148
          %s150 = sand.u32 %s67, 1
          %s151 = smul.addr %s150, 8
          %s152 = scalar_lea.vmem [#allocation9], %s151
          %s154 = ssub.s32 128, 128
          %155 = vsyncadd %s149, %s154
          %s156 = smul.addr %s22, 2
          %s157 = sadd.s32 %s23, %s156
          %s158 = smul.addr %s157, 128
          %s159 = scalar_lea.hbm %s1, %s158
          %s161 = sshll.u32 %s152, 4
          %s162 = int_to_ptr.vmem [resolvable:$true] %s161
          %164 = dma.hbm_to_vmem [thread:$0]  %s159, 128, %s162, %s149
        $region24: #{tpu_custom_call.1} parent=15 // pred_fallthru
          _
      $region16: #{tpu_custom_call.1} parent=5 // pred_fallthru
        _
      %p165 = scmp.le.s32.totalorder 1, %s15
      %p166 = scmp.lt.s32.totalorder %s15, 5
      %p167 = pnand %p165, %p166
      %p168 = pneg %p167
      // Predicated region
      $region25: #{tpu_custom_call.1} parent=5 // pred_check
        _
      $region26: #{tpu_custom_call.1} parent=5 // pred_check_branch
        %170 = sbr.rel (%p167) target = $region28
      $region27: #{tpu_custom_call.1} parent=5 // pred_region
        %s171 = ssub.s32 %s15, 1
        %s172 = sand.u32 %s42, 1
        %s173 = scalar_lea.sflag [#allocation7], %s172
        %s174 = sand.u32 %s42, 1
        %s175 = smul.addr %s174, 32
        %s176 = scalar_lea.vmem [#allocation6], %s175
        // Predicated region
        $region29: #{tpu_custom_call.1} parent=27 // pred_check
          %p177 = pneg %p55
        $region30: #{tpu_custom_call.1} parent=27 // pred_check_branch
          %179 = sbr.rel (%p177) target = $region32
        $region31: #{tpu_custom_call.1} parent=27 // pred_region
          %180 = dma.done %s173, 512
        $region32: #{tpu_custom_call.1} parent=27 // pred_fallthru
          _
        %s181 = sand.u32 %s70, 1
        %s182 = scalar_lea.sflag [#allocation10], %s181
        %s183 = sand.u32 %s70, 1
        %s184 = smul.addr %s183, 8
        %s185 = scalar_lea.vmem [#allocation9], %s184
        // Predicated region
        $region33: #{tpu_custom_call.1} parent=27 // pred_check
          %p186 = pneg %p83
        $region34: #{tpu_custom_call.1} parent=27 // pred_check_branch
          %188 = sbr.rel (%p186) target = $region36
        $region35: #{tpu_custom_call.1} parent=27 // pred_region
          %189 = dma.done %s182, 128
        $region36: #{tpu_custom_call.1} parent=27 // pred_fallthru
          _
        %s190 = sand.u32 %s42, 1
        %s191 = scalar_lea.sflag [#allocation7], %s190
        %s192 = sand.u32 %s42, 1
        %s193 = smul.addr %s192, 32
        %s194 = scalar_lea.vmem [#allocation6], %s193
        %p195 = pneg %p55
        %p196 = pneg %p52
        %s197 = sand.u32 %s70, 1
        %s198 = scalar_lea.sflag [#allocation10], %s197
        %s199 = sand.u32 %s70, 1
        %s200 = smul.addr %s199, 8
        %s201 = scalar_lea.vmem [#allocation9], %s200
        %p202 = pneg %p83
        %p203 = pneg %p80
        %p204 = pneg %p104
        %p205 = pneg %p101
        %p206 = scmp.eq.s32.totalorder %s24, 0
        %p207 = scmp.eq.s32.totalorder %s25, 0
        %p208 = pnand %p206, %p207
        %p209 = pneg %p208
        %p210 = scmp.eq.s32.totalorder %s24, 1
        %p211 = scmp.eq.s32.totalorder %s25, 1
        %p212 = pnand %p210, %p211
        %p213 = pneg %p212
        // Predicated region
        $region37: #{tpu_custom_call.1} parent=27 // pred_check
          _
        $region38: #{tpu_custom_call.1} parent=27 // pred_check_branch
          %215 = sbr.rel (%p208) target = $region40
        $region39: #{tpu_custom_call.1} parent=27 // pred_region
          %vm216 = vcmask 24576
          %217 = vst.msk [vmem:[#allocation2] sm:$0x1] %vm216, 0.0
          %218 = vst.msk [vmem:[#allocation3] sm:$0x1] %vm216, 0.0
          %219 = vst.msk [vmem:[#allocation4] sm:$0x1] %vm216, 0.0
          %vm220 = vcmask 0
          %221 = vst.msk [vmem:[#allocation5] sm:$0x1] %vm220, 0.0
        $region40: #{tpu_custom_call.1} parent=27 // pred_fallthru
          _
        %v222 = vld [vmem:[%s176] sm:$0xff]
        %v223 = vld [vmem:[%s176 + $0x8] sm:$0xff]
        %v224 = vld [vmem:[%s176 + $0x10] sm:$0xff]
        %v225 = vld [vmem:[%s176 + $0x18] sm:$0xff]
        %v226 = vld [vmem:[%s185] sm:$0xff]
        %vm227 = vcmask 130048
        %v228 = vsel %vm227, %v222, -inf
        %v229 = vsel %vm227, %v223, -inf
        %v230 = vsel %vm227, %v224, -inf
        %v231 = vsel %vm227, %v225, -inf
        %v232 = vmax.f32 %v228, %v229
        %v233 = vmax.f32 %v230, %v231
        %v234 = vmax.f32 %v232, %v233
        %v235 = vsub.f32 %v222, %v234
        %v236 = vsub.f32 %v223, %v234
        %v237 = vsub.f32 %v224, %v234
        %v238 = vsub.f32 %v225, %v234
        %v239 = vmul.f32 %v235, 1.442695
        %v240 = vpow.pop %v239
        %v241 = vmul.f32 %v236, 1.442695
        %v242 = vpow.pop %v241
        %v243 = vmul.f32 %v237, 1.442695
        %v244 = vpow.pop %v243
        %v245 = vmul.f32 %v238, 1.442695
        %v246 = vpow.pop %v245
        %v247 = vsel %vm227, %v240, 0.0
        %v248 = vsel %vm227, %v242, 0.0
        %v249 = vadd.f32 %v247, %v248
        %v250 = vsel %vm227, %v244, 0.0
        %v251 = vadd.f32 %v249, %v250
        %v252 = vsel %vm227, %v246, 0.0
        %v253 = vadd.f32 %v251, %v252
        %v254 = vrcp.pop %v253
        %v255 = vmul.f32 %v240, %v254
        %v256 = vmul.f32 %v242, %v254
        %v257 = vmul.f32 %v244, %v254
        %v258 = vmul.f32 %v246, %v254
        %vm259 = vcmp.eq.s32.totalorder %v226, 0
        %vm260 = vcmp.eq.s32.totalorder %v226, 1
        %vm261 = vcmp.eq.s32.totalorder %v226, 2
        %vm262 = vcmp.eq.s32.totalorder %v226, 3
        %v263 = vsel %vm259, 1, 0
        %v264 = vsel %vm260, 1, 0
        %v265 = vsel %vm261, 1, 0
        %v266 = vsel %vm262, 1, 0
        %v267 = vcvt.s32.f32 %v263
        %v268 = vcvt.s32.f32 %v264
        %v269 = vcvt.s32.f32 %v265
        %v270 = vcvt.s32.f32 %v266
        %v271 = vmul.f32 %v255, %v267
        %v272 = vmul.f32 %v256, %v268
        %v273 = vmul.f32 %v257, %v269
        %v274 = vmul.f32 %v258, %v270
        %v275 = vld [vmem:[#allocation2] sm:$0x1]
        %v276 = vsel %vm227, %v271, 0.0
        %277 = vadd.xlane.f32.xlu0 %v276
        %v278 = vpop.xlane.xlu0 %277
        %v279 = vsel %vm227, %v272, 0.0
        %280 = vadd.xlane.f32.xlu0 %v279
        %v281 = vpop.xlane.xlu0 %280
        %v282 = vsel %vm227, %v273, 0.0
        %283 = vadd.xlane.f32.xlu0 %v282
        %v284 = vpop.xlane.xlu0 %283
        %v285 = vsel %vm227, %v274, 0.0
        %286 = vadd.xlane.f32.xlu0 %v285
        %v287 = vpop.xlane.xlu0 %286
        %v292 = vlaneseq
        %v293 = vand.u32 %v292, 127
        %v294 = vlaneseq
        %v295 = vshrl.u32 %v294, 7
        %v296 = vsub.s32 %v293, %v295
        %v297 = vrot.slane %v278, %v296
        %v298 = vlaneseq
        %v299 = vshrl.u32 %v298, 7
        %v300 = vsub.s32 %v293, %v299
        %v301 = vrot.slane %v281, %v300
        %v302 = vlaneseq
        %v303 = vshrl.u32 %v302, 7
        %v304 = vsub.s32 %v293, %v303
        %v305 = vrot.slane %v284, %v304
        %v306 = vlaneseq
        %v307 = vshrl.u32 %v306, 7
        %v308 = vsub.s32 %v293, %v307
        %v309 = vrot.slane %v287, %v308
        %vm310 = vcmask 1041409
        %v311 = vsel %vm310, %v301, %v297
        %vm312 = vcmask 1042434
        %v313 = vsel %vm312, %v305, %v311
        %vm314 = vcmask 1043459
        %v315 = vsel %vm314, %v309, %v313
        %vm317 = vcmask 60416
        %v318 = vsel %vm317, %v315, 0.0
        %319 = vadd.xlane.f32.xlu0 %v318
        %v320 = vpop.xlane.xlu0 %319
        %v322 = vlaneseq
        %v323 = vshrl.u32 %v322, 7
        %v324 = vsub.s32 0, %v323
        %v325 = vrot.slane %v320, %v324
        %v326 = vlaneseq
        %v327 = vshrl.u32 %v326, 7
        %v328 = vsub.s32 1, %v327
        %v329 = vrot.slane %v320, %v328
        %v330 = vlaneseq
        %v331 = vshrl.u32 %v330, 7
        %v332 = vsub.s32 2, %v331
        %v333 = vrot.slane %v320, %v332
        %v334 = vlaneseq
        %v335 = vshrl.u32 %v334, 7
        %v336 = vsub.s32 3, %v335
        %v337 = vrot.slane %v320, %v336
        %v338 = vcombine.low %v325, %v329
        %v339 = vcombine.low %v333, %v337
        %v341 = vunpack.c.l.s4 1966171168
        %v342 = vunpack.c.0.s8 %v341
        %v343 = vlaneseq
        %v344 = vshrl.u32 %v343, 7
        %v345 = vsub.s32 %v342, %v344
        %v346 = vrot.slane %v338, %v345
        %v348 = vunpack.c.l.s4 1966171168
        %v349 = vunpack.c.0.s8 %v348
        %v350 = vlaneseq
        %v351 = vshrl.u32 %v350, 7
        %v352 = vsub.s32 %v349, %v351
        %v353 = vrot.slane %v339, %v352
        %v354 = vcombine.low %v346, %v353
        %v356 = vunpack.c.l.s4 1966171168
        %v357 = vunpack.c.0.s8 %v356
        %v358 = vlaneseq
        %v359 = vshrl.u32 %v358, 7
        %v360 = vsub.s32 %v357, %v359
        %v361 = vrot.slane %v354, %v360
        %362 = vset.pattern.permute.xlu0 0
        %363 = vperm.xlu0 %362, %v361
        %v364 = vpop.permute.xlu0 %363
        %v365 = vlaneseq
        %v366 = vshrl.u32 %v365, 7
        %v367 = vsub.s32 %v293, %v366
        %v368 = vrot.slane %v364, %v367
        %v370 = vunpack.c.l.s4 1966171168
        %v371 = vunpack.c.0.s8 %v370
        %v372 = vlaneseq
        %v373 = vshrl.u32 %v372, 7
        %v374 = vsub.s32 %v371, %v373
        %v375 = vrot.slane %v368, %v374
        %v377 = vunpack.c.l.s4 1966171168
        %v378 = vunpack.c.0.s8 %v377
        %v379 = vlaneseq
        %v380 = vshrl.u32 %v379, 7
        %v381 = vsub.s32 %v378, %v380
        %v382 = vrot.slane %v375, %v381
        %v384 = vadd.f32 %v275, %v382
        %vm385 = vcmask 24576
        %386 = vst.msk [vmem:[#allocation2] sm:$0x1] %vm385, %v384
        %v387 = vld [vmem:[#allocation3] sm:$0x1]
        %v388 = vsel %vm227, %v255, 0.0
        %389 = vadd.xlane.f32.xlu0 %v388
        %v390 = vpop.xlane.xlu0 %389
        %v391 = vsel %vm227, %v256, 0.0
        %392 = vadd.xlane.f32.xlu0 %v391
        %v393 = vpop.xlane.xlu0 %392
        %v394 = vsel %vm227, %v257, 0.0
        %395 = vadd.xlane.f32.xlu0 %v394
        %v396 = vpop.xlane.xlu0 %395
        %v397 = vsel %vm227, %v258, 0.0
        %398 = vadd.xlane.f32.xlu0 %v397
        %v399 = vpop.xlane.xlu0 %398
        %v404 = vlaneseq
        %v405 = vshrl.u32 %v404, 7
        %v406 = vsub.s32 %v293, %v405
        %v407 = vrot.slane %v390, %v406
        %v408 = vlaneseq
        %v409 = vshrl.u32 %v408, 7
        %v410 = vsub.s32 %v293, %v409
        %v411 = vrot.slane %v393, %v410
        %v412 = vlaneseq
        %v413 = vshrl.u32 %v412, 7
        %v414 = vsub.s32 %v293, %v413
        %v415 = vrot.slane %v396, %v414
        %v416 = vlaneseq
        %v417 = vshrl.u32 %v416, 7
        %v418 = vsub.s32 %v293, %v417
        %v419 = vrot.slane %v399, %v418
        %v420 = vsel %vm310, %v411, %v407
        %v421 = vsel %vm312, %v415, %v420
        %v422 = vsel %vm314, %v419, %v421
        %v424 = vsel %vm317, %v422, 0.0
        %425 = vadd.xlane.f32.xlu0 %v424
        %v426 = vpop.xlane.xlu0 %425
        %v428 = vlaneseq
        %v429 = vshrl.u32 %v428, 7
        %v430 = vsub.s32 0, %v429
        %v431 = vrot.slane %v426, %v430
        %v432 = vlaneseq
        %v433 = vshrl.u32 %v432, 7
        %v434 = vsub.s32 1, %v433
        %v435 = vrot.slane %v426, %v434
        %v436 = vlaneseq
        %v437 = vshrl.u32 %v436, 7
        %v438 = vsub.s32 2, %v437
        %v439 = vrot.slane %v426, %v438
        %v440 = vlaneseq
        %v441 = vshrl.u32 %v440, 7
        %v442 = vsub.s32 3, %v441
        %v443 = vrot.slane %v426, %v442
        %v444 = vcombine.low %v431, %v435
        %v445 = vcombine.low %v439, %v443
        %v447 = vunpack.c.l.s4 1966171168
        %v448 = vunpack.c.0.s8 %v447
        %v449 = vlaneseq
        %v450 = vshrl.u32 %v449, 7
        %v451 = vsub.s32 %v448, %v450
        %v452 = vrot.slane %v444, %v451
        %v454 = vunpack.c.l.s4 1966171168
        %v455 = vunpack.c.0.s8 %v454
        %v456 = vlaneseq
        %v457 = vshrl.u32 %v456, 7
        %v458 = vsub.s32 %v455, %v457
        %v459 = vrot.slane %v445, %v458
        %v460 = vcombine.low %v452, %v459
        %v462 = vunpack.c.l.s4 1966171168
        %v463 = vunpack.c.0.s8 %v462
        %v464 = vlaneseq
        %v465 = vshrl.u32 %v464, 7
        %v466 = vsub.s32 %v463, %v465
        %v467 = vrot.slane %v460, %v466
        %468 = vset.pattern.permute.xlu0 0
        %469 = vperm.xlu0 %468, %v467
        %v470 = vpop.permute.xlu0 %469
        %v471 = vlaneseq
        %v472 = vshrl.u32 %v471, 7
        %v473 = vsub.s32 %v293, %v472
        %v474 = vrot.slane %v470, %v473
        %v476 = vunpack.c.l.s4 1966171168
        %v477 = vunpack.c.0.s8 %v476
        %v478 = vlaneseq
        %v479 = vshrl.u32 %v478, 7
        %v480 = vsub.s32 %v477, %v479
        %v481 = vrot.slane %v474, %v480
        %v483 = vunpack.c.l.s4 1966171168
        %v484 = vunpack.c.0.s8 %v483
        %v485 = vlaneseq
        %v486 = vshrl.u32 %v485, 7
        %v487 = vsub.s32 %v484, %v486
        %v488 = vrot.slane %v481, %v487
        %v490 = vadd.f32 %v387, %v488
        %491 = vst.msk [vmem:[#allocation3] sm:$0x1] %vm385, %v490
        %v492 = vld [vmem:[#allocation4] sm:$0x1]
        %v493 = vsel %vm227, %v267, 0.0
        %494 = vadd.xlane.f32.xlu0 %v493
        %v495 = vpop.xlane.xlu0 %494
        %v496 = vsel %vm227, %v268, 0.0
        %497 = vadd.xlane.f32.xlu0 %v496
        %v498 = vpop.xlane.xlu0 %497
        %v499 = vsel %vm227, %v269, 0.0
        %500 = vadd.xlane.f32.xlu0 %v499
        %v501 = vpop.xlane.xlu0 %500
        %v502 = vsel %vm227, %v270, 0.0
        %503 = vadd.xlane.f32.xlu0 %v502
        %v504 = vpop.xlane.xlu0 %503
        %v509 = vlaneseq
        %v510 = vshrl.u32 %v509, 7
        %v511 = vsub.s32 %v293, %v510
        %v512 = vrot.slane %v495, %v511
        %v513 = vlaneseq
        %v514 = vshrl.u32 %v513, 7
        %v515 = vsub.s32 %v293, %v514
        %v516 = vrot.slane %v498, %v515
        %v517 = vlaneseq
        %v518 = vshrl.u32 %v517, 7
        %v519 = vsub.s32 %v293, %v518
        %v520 = vrot.slane %v501, %v519
        %v521 = vlaneseq
        %v522 = vshrl.u32 %v521, 7
        %v523 = vsub.s32 %v293, %v522
        %v524 = vrot.slane %v504, %v523
        %v525 = vsel %vm310, %v516, %v512
        %v526 = vsel %vm312, %v520, %v525
        %v527 = vsel %vm314, %v524, %v526
        %v529 = vsel %vm317, %v527, 0.0
        %530 = vadd.xlane.f32.xlu0 %v529
        %v531 = vpop.xlane.xlu0 %530
        %v533 = vlaneseq
        %v534 = vshrl.u32 %v533, 7
        %v535 = vsub.s32 0, %v534
        %v536 = vrot.slane %v531, %v535
        %v537 = vlaneseq
        %v538 = vshrl.u32 %v537, 7
        %v539 = vsub.s32 1, %v538
        %v540 = vrot.slane %v531, %v539
        %v541 = vlaneseq
        %v542 = vshrl.u32 %v541, 7
        %v543 = vsub.s32 2, %v542
        %v544 = vrot.slane %v531, %v543
        %v545 = vlaneseq
        %v546 = vshrl.u32 %v545, 7
        %v547 = vsub.s32 3, %v546
        %v548 = vrot.slane %v531, %v547
        %v549 = vcombine.low %v536, %v540
        %v550 = vcombine.low %v544, %v548
        %v552 = vunpack.c.l.s4 1966171168
        %v553 = vunpack.c.0.s8 %v552
        %v554 = vlaneseq
        %v555 = vshrl.u32 %v554, 7
        %v556 = vsub.s32 %v553, %v555
        %v557 = vrot.slane %v549, %v556
        %v559 = vunpack.c.l.s4 1966171168
        %v560 = vunpack.c.0.s8 %v559
        %v561 = vlaneseq
        %v562 = vshrl.u32 %v561, 7
        %v563 = vsub.s32 %v560, %v562
        %v564 = vrot.slane %v550, %v563
        %v565 = vcombine.low %v557, %v564
        %v567 = vunpack.c.l.s4 1966171168
        %v568 = vunpack.c.0.s8 %v567
        %v569 = vlaneseq
        %v570 = vshrl.u32 %v569, 7
        %v571 = vsub.s32 %v568, %v570
        %v572 = vrot.slane %v565, %v571
        %573 = vset.pattern.permute.xlu0 0
        %574 = vperm.xlu0 %573, %v572
        %v575 = vpop.permute.xlu0 %574
        %v576 = vlaneseq
        %v577 = vshrl.u32 %v576, 7
        %v578 = vsub.s32 %v293, %v577
        %v579 = vrot.slane %v575, %v578
        %v581 = vunpack.c.l.s4 1966171168
        %v582 = vunpack.c.0.s8 %v581
        %v583 = vlaneseq
        %v584 = vshrl.u32 %v583, 7
        %v585 = vsub.s32 %v582, %v584
        %v586 = vrot.slane %v579, %v585
        %v588 = vunpack.c.l.s4 1966171168
        %v589 = vunpack.c.0.s8 %v588
        %v590 = vlaneseq
        %v591 = vshrl.u32 %v590, 7
        %v592 = vsub.s32 %v589, %v591
        %v593 = vrot.slane %v586, %v592
        %v595 = vadd.f32 %v492, %v593
        %596 = vst.msk [vmem:[#allocation4] sm:$0x1] %vm385, %v595
        %v597 = vadd.f32 %v276, %v279
        %v598 = vadd.f32 %v597, %v282
        %v599 = vadd.f32 %v598, %v285
        %v600 = vsub.f32 1.0, %v599
        %v601 = vmul.f32 %v600, -0.25
        %v602 = vmul.f32 %v601, %v600
        %v603 = vadd.f32 %v599, 1e-08
        %v604 = vlog2.pop %v603
        %v605 = vmul.f32 %v604, 0.6931472
        %v606 = vmul.f32 %v602, %v605
        %v607 = vld [vmem:[#allocation5] sm:$0x1]
        %v608 = vsel %vm227, %v606, 0.0
        %609 = vadd.xlane.f32.xlu0 %v608
        %v610 = vpop.xlane.xlu0 %609
        %v611 = vrot.slane %v610, 4
        %v612 = vadd.f32 %v610, %v611
        %v613 = vrot.slane %v612, 2
        %v614 = vadd.f32 %v612, %v613
        %v615 = vrot.slane %v614, 1
        %v616 = vadd.f32 %v614, %v615
        %s617 = vtos %v616
        %v618 = vstv %s617
        %v619 = vadd.f32 %v607, %v618
        %vm620 = vcmask 0
        %621 = vst.msk [vmem:[#allocation5] sm:$0x1] %vm620, %v619
        // Predicated region
        $region41: #{tpu_custom_call.1} parent=27 // pred_check
          _
        $region42: #{tpu_custom_call.1} parent=27 // pred_check_branch
          %623 = sbr.rel (%p212) target = $region44
        $region43: #{tpu_custom_call.1} parent=27 // pred_region
          %v624 = vld [vmem:[#allocation2] sm:$0x1]
          %v625 = vld [vmem:[#allocation3] sm:$0x1]
          %v626 = vld [vmem:[#allocation4] sm:$0x1]
          %v627 = vadd.f32 %v625, %v626
          %v628 = vmul.f32 %v624, 2.0
          %v629 = vadd.f32 %v628, 1.0
          %v630 = vadd.f32 %v627, 1.0
          %v631 = vrcp.pop %v630
          %v632 = vmul.f32 %v629, %v631
          %v633 = vsel %vm385, %v632, 0.0
          %634 = vadd.xlane.f32.xlu0 %v633
          %v635 = vpop.xlane.xlu0 %634
          %v636 = vrot.slane %v635, 4
          %v637 = vadd.f32 %v635, %v636
          %v638 = vrot.slane %v637, 2
          %v639 = vadd.f32 %v637, %v638
          %v640 = vrot.slane %v639, 1
          %v641 = vadd.f32 %v639, %v640
          %s642 = vtos %v641
          %s643 = smul.f32 %s642, 0.25
          %s644 = ssub.f32 1.0, %s643
          %v645 = vld [vmem:[#allocation5] sm:$0x1]
          %v646 = vmul.f32 %v645, 0.001953125
          %v647 = vstv %s644
          %v648 = vadd.f32 %v647, %v646
          %649 = vst.msk [vmem:[#allocation11] sm:$0x1] %vm620, %v648
        $region44: #{tpu_custom_call.1} parent=27 // pred_fallthru
          _
        // Predicated region
        $region45: #{tpu_custom_call.1} parent=27 // pred_check
          %p650 = pneg %p101
        $region46: #{tpu_custom_call.1} parent=27 // pred_check_branch
          %652 = sbr.rel (%p650) target = $region48
        $region47: #{tpu_custom_call.1} parent=27 // pred_region
          %s654 = ssub.s32 16, 16
          %655 = vsyncadd [#allocation8], %s654
          %s657 = sshll.u32 [#allocation11], 4
          %s658 = int_to_ptr.vmem [resolvable:$true] %s657
          %660 = dma.vmem_to_hbm [thread:$0]  %s658, 16, %s2, [#allocation8]
        $region48: #{tpu_custom_call.1} parent=27 // pred_fallthru
          _
        // Predicated region
        $region49: #{tpu_custom_call.1} parent=27 // pred_check
          %p661 = pneg %p101
        $region50: #{tpu_custom_call.1} parent=27 // pred_check_branch
          %663 = sbr.rel (%p661) target = $region52
        $region51: #{tpu_custom_call.1} parent=27 // pred_region
          %664 = dma.done [#allocation8], 16
        $region52: #{tpu_custom_call.1} parent=27 // pred_fallthru
          _
      $region28: #{tpu_custom_call.1} parent=5 // pred_fallthru
        _
      %p665 = scmp.le.s32.totalorder 2, %s15
      // Predicated region
      $region53: #{tpu_custom_call.1} parent=5 // pred_check
        %p666 = pneg %p665
      $region54: #{tpu_custom_call.1} parent=5 // pred_check_branch
        %668 = sbr.rel (%p666) target = $region56
      $region55: #{tpu_custom_call.1} parent=5 // pred_region
        %s669 = ssub.s32 %s15, 2
      $region56: #{tpu_custom_call.1} parent=5 // pred_fallthru
        _
    $region6: #{tpu_custom_call.1} parent=1 // loop_footer
      %s19 = sadd.s32 1, %s15
    $region7: #{tpu_custom_call.1} parent=1 // loop_footer_branch
      %14 = sbr.rel target = $region3
    $region8: #{tpu_custom_call.1} parent=1 // loop_exit
      _
    %670 = vsyncpa [#allocation7], 1
    %s671 = scalar_lea.sflag [#allocation7], 1
    %672 = vsyncpa %s671, 1
    %673 = vsyncpa [#allocation10], 1
    %s674 = scalar_lea.sflag [#allocation10], 1
    %675 = vsyncpa %s674, 1
    %676 = vsyncpa [#allocation8], 1
    %s677 = scalar_lea.sflag [#allocation8], 1
    %678 = vsyncpa %s677, 1

</llo_original>
